<compile_context>
chip_gen: v7x
topology: tpu7x:2x2x1
jax: 0.10.0
libtpu: 0.0.40
codegen_flags: <defaults>
</compile_context>

<pallas_src>
import functools

import jax
import jax.numpy as jnp
from jax.experimental import pallas as pl
from jax.experimental.pallas import tpu as pltpu


def _round_up(x, m):
    return ((x + m - 1) // m) * m


def _choose_tiling(b_pad, in_pad, out_pad, T, itemsize, *, out_split=None,
                   vmem_budget=28 * 1024 * 1024, mm_target=1024):
    """Pick (out_tile, tt, vmem_need).

    Preference: a single full-width OUT tile (x read from HBM exactly once), then the
    largest time block (mm = tt*b_pad rows, ~mm_target) whose double-buffered blocks
    fit `vmem_budget` (conservative so it is safe on v7x's 64 MiB VMEM).  `out_split`
    forces at least that many OUT tiles (e.g. 2 on v7x: one tile per TensorCore).
    """
    def need(out_tile, tt):
        mm = tt * b_pad
        return (2 * mm * in_pad * itemsize          # x block, double-buffered
                + 2 * in_pad * out_tile * itemsize  # weight tile, double-buffered
                + 2 * mm * out_tile * 2             # bf16 spike out block, double-buffered
                + mm * out_tile * 4                 # f32 syn temporary
                + b_pad * out_tile * 4)             # f32 membrane scratch

    n128 = out_pad // 128
    candidates = [d * 128 for d in range(n128, 0, -1) if n128 % d == 0]
    if out_split is not None and out_split > 1:
        forced = [c for c in candidates if out_pad // c >= out_split]
        if forced:
            candidates = forced

    for out_tile in candidates:
        tt_cap = max(1, min(T, mm_target // b_pad))
        for tt in range(tt_cap, 0, -1):
            if need(out_tile, tt) > vmem_budget:
                continue
            # Prefer a tt that divides T (skips the padded tail time block) as long as
            # it is within 2x of the feasible maximum.
            best = tt
            for cand in range(tt, max(0, tt // 2), -1):
                if T % cand == 0:
                    best = cand
                    break
            return out_tile, best, need(out_tile, best)
    # Fallback (unrealistically large shapes): smallest tiles.
    return 128, 1, need(128, 1)


def _spiking_linear_kernel(x_ref, w_ref, o_ref, mem_ref, *, beta, threshold, tt, b):
    # x_ref:   (tt*b, IN_pad)     bf16  — tt consecutive time steps, batch-major per step
    # w_ref:   (IN_pad, OUT_tile) bf16  — weight tile (pre-transposed for x @ w)
    # o_ref:   (tt*b, OUT_tile)   bf16  — spikes (exactly 0/1)
    # mem_ref: (b, OUT_tile)      f32   — membrane state carried across time blocks
    tb = pl.program_id(1)  # innermost (sequential) time-block index

    @pl.when(tb == 0)
    def _():
        mem_ref[...] = jnp.zeros_like(mem_ref)  # lif.init_leaky(), per OUT tile

    # One MXU matmul covering all tt time steps of this block (M = tt*b rows).
    syn = jnp.dot(x_ref[...], w_ref[...], preferred_element_type=jnp.float32)

    # LIF recurrence: elementwise-only on the VPU, fully unrolled (tt is a small
    # static int); f32 state to avoid drift over long T.  Each store covers full
    # packed bf16 sublanes (b is a multiple of 16) and a lane-dense OUT tile.
    mem = mem_ref[...]
    spk = mem > threshold                                   # reset uses previous mem
    for i in range(tt):
        syn_i = syn[i * b:(i + 1) * b, :]                   # static, tile-aligned slice
        mem = beta * mem + syn_i - jnp.where(spk, threshold, 0.0)
        spk = mem > threshold
        o_ref[i * b:(i + 1) * b, :] = spk.astype(o_ref.dtype)
    mem_ref[...] = mem


def spiking_linear_time_major(x_tbf, w, *, beta=0.9, threshold=1.0,
                              matmul_dtype=jnp.bfloat16, out_split=None):
    """Time-major entry point.  x_tbf: (T, B, in_features); w: (out_features, in_features).
    Returns bf16 spikes (exactly 0/1) of shape (T, B, out_features)."""
    T, B, in_features = x_tbf.shape
    out_features, in_features_w = w.shape
    assert in_features_w == in_features

    itemsize = jnp.dtype(matmul_dtype).itemsize
    in_pad = _round_up(in_features, 128)     # dense MXU K / lane-dense x blocks
    out_pad = _round_up(out_features, 128)   # lane-dense spike stores
    b_pad = _round_up(B, 16)                 # full packed bf16 sublanes per step store

    out_tile, tt, vmem_need = _choose_tiling(
        b_pad, in_pad, out_pad, T, itemsize, out_split=out_split)
    num_out_tiles = out_pad // out_tile
    t_pad = _round_up(T, tt)
    num_t_blocks = t_pad // tt
    mm = tt * b_pad                          # matmul M rows per grid step

    # Padded, time-major, flattened 2-D slab: no in-kernel reshapes.
    x_p = jnp.pad(x_tbf.astype(matmul_dtype),
                  ((0, t_pad - T), (0, b_pad - B), (0, in_pad - in_features)))
    x2d = x_p.reshape(t_pad * b_pad, in_pad)

    w_t = jnp.pad(jnp.transpose(w, (1, 0)).astype(matmul_dtype),
                  ((0, in_pad - in_features), (0, out_pad - out_features)))

    kernel = functools.partial(
        _spiking_linear_kernel,
        beta=float(beta), threshold=float(threshold), tt=tt, b=b_pad)

    flops = 2 * t_pad * b_pad * in_pad * out_pad
    bytes_accessed = (num_out_tiles * x2d.size * itemsize   # x (read once when 1 tile)
                      + w_t.size * itemsize                  # W read once total
                      + t_pad * b_pad * out_pad * 2)         # bf16 spikes out
    vmem_limit = int(min(40 * 1024 * 1024,
                         max(16 * 1024 * 1024, vmem_need + 8 * 1024 * 1024)))

    out2d = pl.pallas_call(
        kernel,
        out_shape=jax.ShapeDtypeStruct((t_pad * b_pad, out_pad), jnp.bfloat16),
        grid_spec=pltpu.PrefetchScalarGridSpec(
            num_scalar_prefetch=0,
            # OUT tiles outer ("parallel": megacore-shardable on v7x, usually extent 1);
            # time inner ("arbitrary": sequential so the membrane scratch carries).
            grid=(num_out_tiles, num_t_blocks),
            in_specs=[
                pl.BlockSpec((mm, in_pad), lambda o, t: (t, 0)),        # x time block
                pl.BlockSpec((in_pad, out_tile), lambda o, t: (0, o)),  # resident W tile
            ],
            out_specs=pl.BlockSpec((mm, out_tile), lambda o, t: (t, o)),
            scratch_shapes=[pltpu.VMEM((b_pad, out_tile), jnp.float32)],  # membrane
        ),
        compiler_params=pltpu.CompilerParams(
            dimension_semantics=("parallel", "arbitrary"),
            vmem_limit_bytes=vmem_limit,
        ),
        cost_estimate=pl.CostEstimate(
            flops=int(flops), transcendentals=0, bytes_accessed=int(bytes_accessed)),
    )(x2d, w_t)

    return out2d.reshape(t_pad, b_pad, out_pad)[:T, :B, :out_features]


def spiking_linear(x, w, *, beta=0.9, threshold=1.0,
                   matmul_dtype=jnp.bfloat16, out_dtype=jnp.float32, out_split=None):
    """PyTorch-shaped wrapper.  x: (B, in_features, T); w: (out_features, in_features).
    Returns spikes of shape (B, out_features, T) in `out_dtype`."""
    # TODO(synk): if adjacent spikformer layers produce/consume time-major (T, B, F)
    # activations, call spiking_linear_time_major directly and drop these two
    # transposes — each is a full HBM pass on a memory-bound layer.
    x_tm = jnp.transpose(x, (2, 0, 1))
    out_tm = spiking_linear_time_major(
        x_tm, w, beta=beta, threshold=threshold,
        matmul_dtype=matmul_dtype, out_split=out_split)
    return jnp.transpose(out_tm, (1, 2, 0)).astype(out_dtype)


def spiking_linear_ref(x, w, *, beta=0.9, threshold=1.0, matmul_dtype=jnp.bfloat16):
    """Pure-JAX reference mirroring snntorch Leaky(beta) + Linear(bias=False), with the
    matmul at the same precision as the kernel (bf16 inputs, f32 accumulation).
    NOTE: for validation against the true PyTorch f32 model, pass
    matmul_dtype=jnp.float32 here and to spiking_linear (hard-threshold spikes near
    1.0 can flip under a precision change)."""
    B, in_features, T = x.shape
    xc = x.astype(matmul_dtype)
    wc = w.astype(matmul_dtype)
    mem = jnp.zeros((B, w.shape[0]), jnp.float32)
    spks = []
    for t in range(T):
        syn = jnp.dot(xc[..., t], wc.T, preferred_element_type=jnp.float32)
        reset = (mem > threshold).astype(jnp.float32)
        mem = beta * mem + syn - reset * threshold
        spk = (mem > threshold).astype(jnp.float32)
        spks.append(spk[..., None])
    return jnp.concatenate(spks, axis=-1)


if __name__ == "__main__":
    B, in_features, out_features, T = 2, 32, 64, 8
    beta = 0.9

    key = jax.random.PRNGKey(0)
    kx, kw = jax.random.split(key)
    # deterministic synthetic inputs; nn.Linear weight shape (out, in), no bias
    x = jax.random.normal(kx, (B, in_features, T), dtype=jnp.float32)
    w = jax.random.normal(kw, (out_features, in_features), dtype=jnp.float32) * (
        1.0 / jnp.sqrt(in_features))

    out = spiking_linear(x, w, beta=beta)
    out = jax.block_until_ready(out)

    ref = spiking_linear_ref(x, w, beta=beta)
    assert out.shape == (B, out_features, T)
    # Spikes are exactly 0/1 in both kernel and reference (same bf16 matmul precision,
    # f32 recurrence), so the comparison is effectively exact.
    assert jnp.allclose(out, ref, atol=1e-5), "mismatch vs. reference"

    print("KERNEL_OK")
</pallas_src>

<mosaic_0001>
module attributes {stable_mosaic.version = 11 : i64} {
  func.func @_spiking_linear_kernel(%arg0: i32, %arg1: i32, %arg2: memref<128x128xbf16, #tpu.memory_space<vmem>>, %arg3: memref<128x128xbf16, #tpu.memory_space<vmem>>, %arg4: memref<128x128xbf16, #tpu.memory_space<vmem>>, %arg5: memref<16x128xf32, #tpu.memory_space<vmem>>) attributes {dimension_semantics = [#tpu.dimension_semantics<parallel>, #tpu.dimension_semantics<arbitrary>], iteration_bounds = array<i64: 1, 1>, scalar_prefetch = 0 : i64, scratch_operands = 1 : i64, tpu.core_type = #tpu.core_type<tc>, window_params = [{transform_indices = @transform_0, window_bounds = array<i64: 128, 128>}, {transform_indices = @transform_1, window_bounds = array<i64: 128, 128>}, {transform_indices = @transform_2, window_bounds = array<i64: 128, 128>}]} {
    %c0_i32 = arith.constant 0 : i32
    %0 = arith.cmpi eq, %arg1, %c0_i32 : i32
    %1 = arith.extui %0 : i1 to i32
    %c0_i32_0 = arith.constant 0 : i32
    %2 = arith.cmpi ne, %1, %c0_i32_0 : i32
    scf.if %2 {
      %cst_50 = arith.constant 0.000000e+00 : f32
      %122 = vector.broadcast %cst_50 : f32 to vector<16x128xf32>
      %c0_51 = arith.constant 0 : index
      %c0_52 = arith.constant 0 : index
      %123 = vector.load %arg5[%c0_51, %c0_52] : memref<16x128xf32, #tpu.memory_space<vmem>>, vector<16x128xf32>
      tpu.vector_store %arg5[%c0_51, %c0_52], %122 {strides = array<i32>} : memref<16x128xf32, #tpu.memory_space<vmem>>, vector<16x128xf32>,
    } else {
    }
    %c0 = arith.constant 0 : index
    %c0_1 = arith.constant 0 : index
    %3 = vector.load %arg2[%c0, %c0_1] : memref<128x128xbf16, #tpu.memory_space<vmem>>, vector<128x128xbf16>
    %c0_2 = arith.constant 0 : index
    %c0_3 = arith.constant 0 : index
    %4 = vector.load %arg3[%c0_2, %c0_3] : memref<128x128xbf16, #tpu.memory_space<vmem>>, vector<128x128xbf16>
    %cst = arith.constant dense<0.000000e+00> : vector<128x128xf32>
    %5 = tpu.matmul %3, %4, %cst {dimension_numbers = #tpu.dot_dimension_numbers<[1], [0], [0], [1], [0, 0, 1, 1], [], []>} : vector<128x128xbf16>, vector<128x128xbf16>, vector<128x128xf32> -> vector<128x128xf32>
    %c0_4 = arith.constant 0 : index
    %c0_5 = arith.constant 0 : index
    %6 = vector.load %arg5[%c0_4, %c0_5] : memref<16x128xf32, #tpu.memory_space<vmem>>, vector<16x128xf32>
    %cst_6 = arith.constant 1.000000e+00 : f32
    %7 = vector.broadcast %cst_6 : f32 to vector<16x128xf32>
    %8 = arith.cmpf ogt, %6, %7 : vector<16x128xf32>
    %9 = vector.extract_strided_slice %5 {offsets = [0, 0], sizes = [16, 128], strides = [1, 1]} : vector<128x128xf32> to vector<16x128xf32>
    %cst_7 = arith.constant 0.899999976 : f32
    %10 = vector.broadcast %cst_7 : f32 to vector<16x128xf32>
    %11 = arith.mulf %10, %6 : vector<16x128xf32>
    %12 = arith.addf %11, %9 : vector<16x128xf32>
    %cst_8 = arith.constant 1.000000e+00 : f32
    %cst_9 = arith.constant 0.000000e+00 : f32
    %13 = vector.broadcast %cst_8 : f32 to vector<16x128xf32>
    %14 = vector.broadcast %cst_9 : f32 to vector<16x128xf32>
    %15 = arith.select %8, %13, %14 : vector<16x128xi1>, vector<16x128xf32>
    %16 = arith.subf %12, %15 : vector<16x128xf32>
    %cst_10 = arith.constant 1.000000e+00 : f32
    %17 = vector.broadcast %cst_10 : f32 to vector<16x128xf32>
    %18 = arith.cmpf ogt, %16, %17 : vector<16x128xf32>
    %19 = arith.extui %18 : vector<16x128xi1> to vector<16x128xi32>
    %20 = arith.sitofp %19 : vector<16x128xi32> to vector<16x128xf32>
    %21 = arith.truncf %20 : vector<16x128xf32> to vector<16x128xbf16>
    %c0_11 = arith.constant 0 : index
    %c0_12 = arith.constant 0 : index
    %22 = vector.load %arg4[%c0_11, %c0_12] : memref<128x128xbf16, #tpu.memory_space<vmem>>, vector<16x128xbf16>
    tpu.vector_store %arg4[%c0_11, %c0_12], %21 {strides = array<i32>} : memref<128x128xbf16, #tpu.memory_space<vmem>>, vector<16x128xbf16>,
    %23 = vector.extract_strided_slice %5 {offsets = [16, 0], sizes = [16, 128], strides = [1, 1]} : vector<128x128xf32> to vector<16x128xf32>
    %cst_13 = arith.constant 0.899999976 : f32
    %24 = vector.broadcast %cst_13 : f32 to vector<16x128xf32>
    %25 = arith.mulf %24, %16 : vector<16x128xf32>
    %26 = arith.addf %25, %23 : vector<16x128xf32>
    %cst_14 = arith.constant 1.000000e+00 : f32
    %cst_15 = arith.constant 0.000000e+00 : f32
    %27 = vector.broadcast %cst_14 : f32 to vector<16x128xf32>
    %28 = vector.broadcast %cst_15 : f32 to vector<16x128xf32>
    %29 = arith.select %18, %27, %28 : vector<16x128xi1>, vector<16x128xf32>
    %30 = arith.subf %26, %29 : vector<16x128xf32>
    %cst_16 = arith.constant 1.000000e+00 : f32
    %31 = vector.broadcast %cst_16 : f32 to vector<16x128xf32>
    %32 = arith.cmpf ogt, %30, %31 : vector<16x128xf32>
    %33 = arith.extui %32 : vector<16x128xi1> to vector<16x128xi32>
    %34 = arith.sitofp %33 : vector<16x128xi32> to vector<16x128xf32>
    %35 = arith.truncf %34 : vector<16x128xf32> to vector<16x128xbf16>
    %c16 = arith.constant 16 : index
    %c0_17 = arith.constant 0 : index
    %36 = vector.load %arg4[%c16, %c0_17] : memref<128x128xbf16, #tpu.memory_space<vmem>>, vector<16x128xbf16>
    tpu.vector_store %arg4[%c16, %c0_17], %35 {strides = array<i32>} : memref<128x128xbf16, #tpu.memory_space<vmem>>, vector<16x128xbf16>,
    %37 = vector.extract_strided_slice %5 {offsets = [32, 0], sizes = [16, 128], strides = [1, 1]} : vector<128x128xf32> to vector<16x128xf32>
    %cst_18 = arith.constant 0.899999976 : f32
    %38 = vector.broadcast %cst_18 : f32 to vector<16x128xf32>
    %39 = arith.mulf %38, %30 : vector<16x128xf32>
    %40 = arith.addf %39, %37 : vector<16x128xf32>
    %cst_19 = arith.constant 1.000000e+00 : f32
    %cst_20 = arith.constant 0.000000e+00 : f32
    %41 = vector.broadcast %cst_19 : f32 to vector<16x128xf32>
    %42 = vector.broadcast %cst_20 : f32 to vector<16x128xf32>
    %43 = arith.select %32, %41, %42 : vector<16x128xi1>, vector<16x128xf32>
    %44 = arith.subf %40, %43 : vector<16x128xf32>
    %cst_21 = arith.constant 1.000000e+00 : f32
    %45 = vector.broadcast %cst_21 : f32 to vector<16x128xf32>
    %46 = arith.cmpf ogt, %44, %45 : vector<16x128xf32>
    %47 = arith.extui %46 : vector<16x128xi1> to vector<16x128xi32>
    %48 = arith.sitofp %47 : vector<16x128xi32> to vector<16x128xf32>
    %49 = arith.truncf %48 : vector<16x128xf32> to vector<16x128xbf16>
    %c32 = arith.constant 32 : index
    %c0_22 = arith.constant 0 : index
    %50 = vector.load %arg4[%c32, %c0_22] : memref<128x128xbf16, #tpu.memory_space<vmem>>, vector<16x128xbf16>
    tpu.vector_store %arg4[%c32, %c0_22], %49 {strides = array<i32>} : memref<128x128xbf16, #tpu.memory_space<vmem>>, vector<16x128xbf16>,
    %51 = vector.extract_strided_slice %5 {offsets = [48, 0], sizes = [16, 128], strides = [1, 1]} : vector<128x128xf32> to vector<16x128xf32>
    %cst_23 = arith.constant 0.899999976 : f32
    %52 = vector.broadcast %cst_23 : f32 to vector<16x128xf32>
    %53 = arith.mulf %52, %44 : vector<16x128xf32>
    %54 = arith.addf %53, %51 : vector<16x128xf32>
    %cst_24 = arith.constant 1.000000e+00 : f32
    %cst_25 = arith.constant 0.000000e+00 : f32
    %55 = vector.broadcast %cst_24 : f32 to vector<16x128xf32>
    %56 = vector.broadcast %cst_25 : f32 to vector<16x128xf32>
    %57 = arith.select %46, %55, %56 : vector<16x128xi1>, vector<16x128xf32>
    %58 = arith.subf %54, %57 : vector<16x128xf32>
    %cst_26 = arith.constant 1.000000e+00 : f32
    %59 = vector.broadcast %cst_26 : f32 to vector<16x128xf32>
    %60 = arith.cmpf ogt, %58, %59 : vector<16x128xf32>
    %61 = arith.extui %60 : vector<16x128xi1> to vector<16x128xi32>
    %62 = arith.sitofp %61 : vector<16x128xi32> to vector<16x128xf32>
    %63 = arith.truncf %62 : vector<16x128xf32> to vector<16x128xbf16>
    %c48 = arith.constant 48 : index
    %c0_27 = arith.constant 0 : index
    %64 = vector.load %arg4[%c48, %c0_27] : memref<128x128xbf16, #tpu.memory_space<vmem>>, vector<16x128xbf16>
    tpu.vector_store %arg4[%c48, %c0_27], %63 {strides = array<i32>} : memref<128x128xbf16, #tpu.memory_space<vmem>>, vector<16x128xbf16>,
    %65 = vector.extract_strided_slice %5 {offsets = [64, 0], sizes = [16, 128], strides = [1, 1]} : vector<128x128xf32> to vector<16x128xf32>
    %cst_28 = arith.constant 0.899999976 : f32
    %66 = vector.broadcast %cst_28 : f32 to vector<16x128xf32>
    %67 = arith.mulf %66, %58 : vector<16x128xf32>
    %68 = arith.addf %67, %65 : vector<16x128xf32>
    %cst_29 = arith.constant 1.000000e+00 : f32
    %cst_30 = arith.constant 0.000000e+00 : f32
    %69 = vector.broadcast %cst_29 : f32 to vector<16x128xf32>
    %70 = vector.broadcast %cst_30 : f32 to vector<16x128xf32>
    %71 = arith.select %60, %69, %70 : vector<16x128xi1>, vector<16x128xf32>
    %72 = arith.subf %68, %71 : vector<16x128xf32>
    %cst_31 = arith.constant 1.000000e+00 : f32
    %73 = vector.broadcast %cst_31 : f32 to vector<16x128xf32>
    %74 = arith.cmpf ogt, %72, %73 : vector<16x128xf32>
    %75 = arith.extui %74 : vector<16x128xi1> to vector<16x128xi32>
    %76 = arith.sitofp %75 : vector<16x128xi32> to vector<16x128xf32>
    %77 = arith.truncf %76 : vector<16x128xf32> to vector<16x128xbf16>
    %c64 = arith.constant 64 : index
    %c0_32 = arith.constant 0 : index
    %78 = vector.load %arg4[%c64, %c0_32] : memref<128x128xbf16, #tpu.memory_space<vmem>>, vector<16x128xbf16>
    tpu.vector_store %arg4[%c64, %c0_32], %77 {strides = array<i32>} : memref<128x128xbf16, #tpu.memory_space<vmem>>, vector<16x128xbf16>,
    %79 = vector.extract_strided_slice %5 {offsets = [80, 0], sizes = [16, 128], strides = [1, 1]} : vector<128x128xf32> to vector<16x128xf32>
    %cst_33 = arith.constant 0.899999976 : f32
    %80 = vector.broadcast %cst_33 : f32 to vector<16x128xf32>
    %81 = arith.mulf %80, %72 : vector<16x128xf32>
    %82 = arith.addf %81, %79 : vector<16x128xf32>
    %cst_34 = arith.constant 1.000000e+00 : f32
    %cst_35 = arith.constant 0.000000e+00 : f32
    %83 = vector.broadcast %cst_34 : f32 to vector<16x128xf32>
    %84 = vector.broadcast %cst_35 : f32 to vector<16x128xf32>
    %85 = arith.select %74, %83, %84 : vector<16x128xi1>, vector<16x128xf32>
    %86 = arith.subf %82, %85 : vector<16x128xf32>
    %cst_36 = arith.constant 1.000000e+00 : f32
    %87 = vector.broadcast %cst_36 : f32 to vector<16x128xf32>
    %88 = arith.cmpf ogt, %86, %87 : vector<16x128xf32>
    %89 = arith.extui %88 : vector<16x128xi1> to vector<16x128xi32>
    %90 = arith.sitofp %89 : vector<16x128xi32> to vector<16x128xf32>
    %91 = arith.truncf %90 : vector<16x128xf32> to vector<16x128xbf16>
    %c80 = arith.constant 80 : index
    %c0_37 = arith.constant 0 : index
    %92 = vector.load %arg4[%c80, %c0_37] : memref<128x128xbf16, #tpu.memory_space<vmem>>, vector<16x128xbf16>
    tpu.vector_store %arg4[%c80, %c0_37], %91 {strides = array<i32>} : memref<128x128xbf16, #tpu.memory_space<vmem>>, vector<16x128xbf16>,
    %93 = vector.extract_strided_slice %5 {offsets = [96, 0], sizes = [16, 128], strides = [1, 1]} : vector<128x128xf32> to vector<16x128xf32>
    %cst_38 = arith.constant 0.899999976 : f32
    %94 = vector.broadcast %cst_38 : f32 to vector<16x128xf32>
    %95 = arith.mulf %94, %86 : vector<16x128xf32>
    %96 = arith.addf %95, %93 : vector<16x128xf32>
    %cst_39 = arith.constant 1.000000e+00 : f32
    %cst_40 = arith.constant 0.000000e+00 : f32
    %97 = vector.broadcast %cst_39 : f32 to vector<16x128xf32>
    %98 = vector.broadcast %cst_40 : f32 to vector<16x128xf32>
    %99 = arith.select %88, %97, %98 : vector<16x128xi1>, vector<16x128xf32>
    %100 = arith.subf %96, %99 : vector<16x128xf32>
    %cst_41 = arith.constant 1.000000e+00 : f32
    %101 = vector.broadcast %cst_41 : f32 to vector<16x128xf32>
    %102 = arith.cmpf ogt, %100, %101 : vector<16x128xf32>
    %103 = arith.extui %102 : vector<16x128xi1> to vector<16x128xi32>
    %104 = arith.sitofp %103 : vector<16x128xi32> to vector<16x128xf32>
    %105 = arith.truncf %104 : vector<16x128xf32> to vector<16x128xbf16>
    %c96 = arith.constant 96 : index
    %c0_42 = arith.constant 0 : index
    %106 = vector.load %arg4[%c96, %c0_42] : memref<128x128xbf16, #tpu.memory_space<vmem>>, vector<16x128xbf16>
    tpu.vector_store %arg4[%c96, %c0_42], %105 {strides = array<i32>} : memref<128x128xbf16, #tpu.memory_space<vmem>>, vector<16x128xbf16>,
    %107 = vector.extract_strided_slice %5 {offsets = [112, 0], sizes = [16, 128], strides = [1, 1]} : vector<128x128xf32> to vector<16x128xf32>
    %cst_43 = arith.constant 0.899999976 : f32
    %108 = vector.broadcast %cst_43 : f32 to vector<16x128xf32>
    %109 = arith.mulf %108, %100 : vector<16x128xf32>
    %110 = arith.addf %109, %107 : vector<16x128xf32>
    %cst_44 = arith.constant 1.000000e+00 : f32
    %cst_45 = arith.constant 0.000000e+00 : f32
    %111 = vector.broadcast %cst_44 : f32 to vector<16x128xf32>
    %112 = vector.broadcast %cst_45 : f32 to vector<16x128xf32>
    %113 = arith.select %102, %111, %112 : vector<16x128xi1>, vector<16x128xf32>
    %114 = arith.subf %110, %113 : vector<16x128xf32>
    %cst_46 = arith.constant 1.000000e+00 : f32
    %115 = vector.broadcast %cst_46 : f32 to vector<16x128xf32>
    %116 = arith.cmpf ogt, %114, %115 : vector<16x128xf32>
    %117 = arith.extui %116 : vector<16x128xi1> to vector<16x128xi32>
    %118 = arith.sitofp %117 : vector<16x128xi32> to vector<16x128xf32>
    %119 = arith.truncf %118 : vector<16x128xf32> to vector<16x128xbf16>
    %c112 = arith.constant 112 : index
    %c0_47 = arith.constant 0 : index
    %120 = vector.load %arg4[%c112, %c0_47] : memref<128x128xbf16, #tpu.memory_space<vmem>>, vector<16x128xbf16>
    tpu.vector_store %arg4[%c112, %c0_47], %119 {strides = array<i32>} : memref<128x128xbf16, #tpu.memory_space<vmem>>, vector<16x128xbf16>,
    %c0_48 = arith.constant 0 : index
    %c0_49 = arith.constant 0 : index
    %121 = vector.load %arg5[%c0_48, %c0_49] : memref<16x128xf32, #tpu.memory_space<vmem>>, vector<16x128xf32>
    tpu.vector_store %arg5[%c0_48, %c0_49], %114 {strides = array<i32>} : memref<16x128xf32, #tpu.memory_space<vmem>>, vector<16x128xf32>,
    return
  }
  func.func @transform_0(%arg0: i32, %arg1: i32) -> (i32, i32) {
    %c0_i32 = arith.constant 0 : i32
    %c0_i32_0 = arith.constant 0 : i32
    return %arg1, %c0_i32 : i32, i32
  }
  func.func @transform_1(%arg0: i32, %arg1: i32) -> (i32, i32) {
    %c0_i32 = arith.constant 0 : i32
    %c0_i32_0 = arith.constant 0 : i32
    return %c0_i32, %arg0 : i32, i32
  }
  func.func @transform_2(%arg0: i32, %arg1: i32) -> (i32, i32) {
    %c0_i32 = arith.constant 0 : i32
    return %arg1, %arg0 : i32, i32
  }
}

</mosaic_0001>

<llo_original>
// kernel: tpu_custom_call.1
$region0: #{tpu_custom_call.1}
  #allocation0 [shape = 'u32[]', space=smem, size = 0x4, offset = 0x4, fixed_abs, tag = 'smem constant byte address 0x4 - core index']
  #allocation1 [shape = 'u32[144,128]{1,0:T(1,128)}', space=vmem, size = 0x12000, scoped, tag = 'internal scratch']
  #allocation2 [shape = 'f32[16,128]{1,0:T(8,128)}', space=vmem, size = 0x2000, scoped, tag = 'scratch operand']
  %s0 = inlined_call_operand.hbm [shape: bf16[128,128], index: 0, kind: input, shape index: {}]
  %s1 = inlined_call_operand.hbm [shape: bf16[128,128], index: 1, kind: input, shape index: {}]
  %s2 = inlined_call_operand.hbm [shape: bf16[128,128], index: 2, kind: output, shape index: {}]
  %s3 = sld [smem:[#allocation0]]
  $region30: #{tpu_custom_call.1} parent=0
    _
  %s5 = ssub.s32 1, %s3
  %s6 = scalar_select 0, %s5, %s3
  $region1: #{tpu_custom_call.1} parent=0
    #allocation3 [shape = 'u8[32768]{0}', space=vmem, size = 0x8000, scoped, tag = 'input window, operand 0, single buffered']
    #allocation4 [shape = 's32[1]{0}', space=sflag, size = 0x4, scoped, tag = 'scoped memory for tpu_custom_call.1']
    #allocation5 [shape = 's32[1]{0}', space=sflag, size = 0x4, scoped, tag = 'scoped memory for tpu_custom_call.1']
    #allocation6 [shape = 'u8[32768]{0}', space=vmem, size = 0x8000, scoped, tag = 'input window, operand 1, single buffered']
    #allocation7 [shape = 's32[1]{0}', space=sflag, size = 0x4, scoped, tag = 'scoped memory for tpu_custom_call.1']
    #allocation8 [shape = 'u8[32768]{0}', space=vmem, size = 0x8000, scoped, tag = 'output window, operand 0, single buffered']
    %7 = vsyncpa [#allocation4], 0
    %8 = vsyncpa [#allocation7], 0
    %9 = vsyncpa [#allocation5], 0
    // Predicated region
    $region2: #{tpu_custom_call.1} parent=1 // pred_check
      _
    $region3: #{tpu_custom_call.1} parent=1 // pred_check_branch
      %11 = sbr.rel (0) target = $region5
    $region4: #{tpu_custom_call.1} parent=1 // pred_region
      %s13 = ssub.s32 1024, 1024
      %14 = vsyncadd [#allocation4], %s13
      %s15 = sshll.u32 [#allocation3], 4
      %s16 = int_to_ptr.vmem [resolvable:$true] %s15
      %21 = dma.hbm_to_vmem [thread:$0]  %s0, 1024, %s16, [#allocation4], 64, 64, 4
    $region5: #{tpu_custom_call.1} parent=1 // pred_fallthru
      _
    // Predicated region
    $region6: #{tpu_custom_call.1} parent=1 // pred_check
      _
    $region7: #{tpu_custom_call.1} parent=1 // pred_check_branch
      %23 = sbr.rel (0) target = $region9
    $region8: #{tpu_custom_call.1} parent=1 // pred_region
      %s25 = ssub.s32 1024, 1024
      %26 = vsyncadd [#allocation7], %s25
      %s27 = sshll.u32 [#allocation6], 4
      %s28 = int_to_ptr.vmem [resolvable:$true] %s27
      %33 = dma.hbm_to_vmem [thread:$0]  %s1, 1024, %s28, [#allocation7], 64, 64, 4
    $region9: #{tpu_custom_call.1} parent=1 // pred_fallthru
      _
    // Predicated region
    $region10: #{tpu_custom_call.1} parent=1 // pred_check
      _
    $region11: #{tpu_custom_call.1} parent=1 // pred_check_branch
      %35 = sbr.rel (0) target = $region13
    $region12: #{tpu_custom_call.1} parent=1 // pred_region
      %36 = dma.done [#allocation4], 1024
    $region13: #{tpu_custom_call.1} parent=1 // pred_fallthru
      _
    // Predicated region
    $region14: #{tpu_custom_call.1} parent=1 // pred_check
      _
    $region15: #{tpu_custom_call.1} parent=1 // pred_check_branch
      %38 = sbr.rel (0) target = $region17
    $region16: #{tpu_custom_call.1} parent=1 // pred_region
      %39 = dma.done [#allocation7], 1024
    $region17: #{tpu_custom_call.1} parent=1 // pred_fallthru
      _
    %p41 = scmp.eq.s32.totalorder 0, 0
    // Predicated region
    $region18: #{tpu_custom_call.1} parent=1 // pred_check
      %p42 = pneg %p41
    $region19: #{tpu_custom_call.1} parent=1 // pred_check_branch
      %44 = sbr.rel (%p42) target = $region21
    $region20: #{tpu_custom_call.1} parent=1 // pred_region
      %45 = vst [vmem:[#allocation2] sm:$0xff] 0.0
      %46 = vst [vmem:[#allocation2 + $0x8] sm:$0xff] 0.0
    $region21: #{tpu_custom_call.1} parent=1 // pred_fallthru
      _
    %v47 = vld [vmem:[#allocation3] sm:$0xf]
    %v48 = vld [vmem:[#allocation3 + $0x4] sm:$0xf]
    %v49 = vld [vmem:[#allocation3 + $0x8] sm:$0xf]
    %v50 = vld [vmem:[#allocation3 + $0xc] sm:$0xf]
    %v51 = vld [vmem:[#allocation3 + $0x10] sm:$0xf]
    %v52 = vld [vmem:[#allocation3 + $0x14] sm:$0xf]
    %v53 = vld [vmem:[#allocation3 + $0x18] sm:$0xf]
    %v54 = vld [vmem:[#allocation3 + $0x1c] sm:$0xf]
    %v55 = vld [vmem:[#allocation3 + $0x20] sm:$0xf]
    %v56 = vld [vmem:[#allocation3 + $0x24] sm:$0xf]
    %v57 = vld [vmem:[#allocation3 + $0x28] sm:$0xf]
    %v58 = vld [vmem:[#allocation3 + $0x2c] sm:$0xf]
    %v59 = vld [vmem:[#allocation3 + $0x30] sm:$0xf]
    %v60 = vld [vmem:[#allocation3 + $0x34] sm:$0xf]
    %v61 = vld [vmem:[#allocation3 + $0x38] sm:$0xf]
    %v62 = vld [vmem:[#allocation3 + $0x3c] sm:$0xf]
    %v63 = vld [vmem:[#allocation6] sm:$0xf]
    %v64 = vld [vmem:[#allocation6 + $0x4] sm:$0xf]
    %v65 = vld [vmem:[#allocation6 + $0x8] sm:$0xf]
    %v66 = vld [vmem:[#allocation6 + $0xc] sm:$0xf]
    %v67 = vld [vmem:[#allocation6 + $0x10] sm:$0xf]
    %v68 = vld [vmem:[#allocation6 + $0x14] sm:$0xf]
    %v69 = vld [vmem:[#allocation6 + $0x18] sm:$0xf]
    %v70 = vld [vmem:[#allocation6 + $0x1c] sm:$0xf]
    %v71 = vld [vmem:[#allocation6 + $0x20] sm:$0xf]
    %v72 = vld [vmem:[#allocation6 + $0x24] sm:$0xf]
    %v73 = vld [vmem:[#allocation6 + $0x28] sm:$0xf]
    %v74 = vld [vmem:[#allocation6 + $0x2c] sm:$0xf]
    %v75 = vld [vmem:[#allocation6 + $0x30] sm:$0xf]
    %v76 = vld [vmem:[#allocation6 + $0x34] sm:$0xf]
    %v77 = vld [vmem:[#allocation6 + $0x38] sm:$0xf]
    %v78 = vld [vmem:[#allocation6 + $0x3c] sm:$0xf]
    %v95 = vunpack.c.l.b16 %v47
    %v96 = vunpack.c.l.b16 %v48
    %v97 = vunpack.c.l.b16 %v49
    %v98 = vunpack.c.l.b16 %v50
    %v99 = vunpack.c.l.b16 %v51
    %v100 = vunpack.c.l.b16 %v52
    %v101 = vunpack.c.l.b16 %v53
    %v102 = vunpack.c.l.b16 %v54
    %v103 = vunpack.c.l.b16 %v55
    %v104 = vunpack.c.l.b16 %v56
    %v105 = vunpack.c.l.b16 %v57
    %v106 = vunpack.c.l.b16 %v58
    %v107 = vunpack.c.l.b16 %v59
    %v108 = vunpack.c.l.b16 %v60
    %v109 = vunpack.c.l.b16 %v61
    %v110 = vunpack.c.l.b16 %v62
    %v111 = vpack.c.b16 %v96, %v95
    %v112 = vpack.c.b16 %v98, %v97
    %v113 = vpack.c.b16 %v100, %v99
    %v114 = vpack.c.b16 %v102, %v101
    %v115 = vpack.c.b16 %v104, %v103
    %v116 = vpack.c.b16 %v106, %v105
    %v117 = vpack.c.b16 %v108, %v107
    %v118 = vpack.c.b16 %v110, %v109
    %v143 = vunpack.c.l.b16 %v63
    %v144 = vunpack.c.l.b16 %v64
    %v145 = vunpack.c.l.b16 %v65
    %v146 = vunpack.c.l.b16 %v66
    %v147 = vunpack.c.l.b16 %v67
    %v148 = vunpack.c.l.b16 %v68
    %v149 = vunpack.c.l.b16 %v69
    %v150 = vunpack.c.l.b16 %v70
    %v151 = vunpack.c.l.b16 %v71
    %v152 = vunpack.c.l.b16 %v72
    %v153 = vunpack.c.l.b16 %v73
    %v154 = vunpack.c.l.b16 %v74
    %v155 = vunpack.c.l.b16 %v75
    %v156 = vunpack.c.l.b16 %v76
    %v157 = vunpack.c.l.b16 %v77
    %v158 = vunpack.c.l.b16 %v78
    %v159 = vpack.c.b16 %v144, %v143
    %v160 = vpack.c.b16 %v146, %v145
    %v161 = vpack.c.b16 %v148, %v147
    %v162 = vpack.c.b16 %v150, %v149
    %v163 = vpack.c.b16 %v152, %v151
    %v164 = vpack.c.b16 %v154, %v153
    %v165 = vpack.c.b16 %v156, %v155
    %v166 = vpack.c.b16 %v158, %v157
    %175 = vmatprep.subr.bf16.mxu0 0
    %176 = vmatpush1.bf16.msra.mxu0 %v159
    %177 = vmatprep.subr.bf16.mxu0 0
    %178 = vmatpush1.bf16.msra.mxu0 %v160
    %179 = vmatprep.subr.bf16.mxu0 0
    %180 = vmatpush1.bf16.msra.mxu0 %v161
    %181 = vmatprep.subr.bf16.mxu0 0
    %182 = vmatpush1.bf16.msra.mxu0 %v162
    %183 = vmatprep.subr.bf16.mxu0 0
    %184 = vmatpush1.bf16.msra.mxu0 %v163
    %185 = vmatprep.subr.bf16.mxu0 0
    %186 = vmatpush1.bf16.msra.mxu0 %v164
    %187 = vmatprep.subr.bf16.mxu0 0
    %188 = vmatpush1.bf16.msra.mxu0 %v165
    %189 = vmatprep.subr.bf16.mxu0 0
    %190 = vmatpush1.bf16.msra.mxu0 %v166
    %191 = vmatprep.subr.bf16.mxu0 0
    %192 = vmatpush1.bf16.msra.mxu0 0
    %193 = vmatprep.subr.bf16.mxu0 0
    %194 = vmatpush1.bf16.msra.mxu0 0
    %195 = vmatprep.subr.bf16.mxu0 0
    %196 = vmatpush1.bf16.msra.mxu0 0
    %197 = vmatprep.subr.bf16.mxu0 0
    %198 = vmatpush1.bf16.msra.mxu0 0
    %199 = vmatprep.subr.bf16.mxu0 0
    %200 = vmatpush1.bf16.msra.mxu0 0
    %201 = vmatprep.subr.bf16.mxu0 0
    %202 = vmatpush1.bf16.msra.mxu0 0
    %203 = vmatprep.subr.bf16.mxu0 0
    %204 = vmatpush1.bf16.msra.mxu0 0
    %205 = vmatprep.subr.bf16.mxu0 0
    %206 = vmatpush1.bf16.msra.mxu0 0
    %207 = vmatprep.mubr.bf16.mxu0 0
    %208 = vmatmul.mubr.bf16.gmra.mrb[0].mxu0 %v111
    %v209 = vpop.f32.mrb[0].mxu0
    %v210 = vadd.f32 0.0, %v209
    %v211 = vpop.f32.mrb[0].mxu0
    %v212 = vpop.f32.mrb[0].mxu0
    %v213 = vadd.f32 0.0, %v212
    %v214 = vpop.f32.mrb[0].mxu0
    %215 = vmatprep.mubr.bf16.mxu0 0
    %216 = vmatmul.mubr.bf16.gmra.mrb[0].mxu0 %v112
    %v217 = vpop.f32.mrb[0].mxu0
    %v218 = vadd.f32 0.0, %v217
    %v219 = vpop.f32.mrb[0].mxu0
    %v220 = vpop.f32.mrb[0].mxu0
    %v221 = vadd.f32 0.0, %v220
    %v222 = vpop.f32.mrb[0].mxu0
    %223 = vmatprep.mubr.bf16.mxu0 0
    %224 = vmatmul.mubr.bf16.gmra.mrb[0].mxu0 %v113
    %v225 = vpop.f32.mrb[0].mxu0
    %v226 = vadd.f32 0.0, %v225
    %v227 = vpop.f32.mrb[0].mxu0
    %v228 = vpop.f32.mrb[0].mxu0
    %v229 = vadd.f32 0.0, %v228
    %v230 = vpop.f32.mrb[0].mxu0
    %231 = vmatprep.mubr.bf16.mxu0 0
    %232 = vmatmul.mubr.bf16.gmra.mrb[0].mxu0 %v114
    %v233 = vpop.f32.mrb[0].mxu0
    %v234 = vadd.f32 0.0, %v233
    %v235 = vpop.f32.mrb[0].mxu0
    %v236 = vpop.f32.mrb[0].mxu0
    %v237 = vadd.f32 0.0, %v236
    %v238 = vpop.f32.mrb[0].mxu0
    %239 = vmatprep.mubr.bf16.mxu0 0
    %240 = vmatmul.mubr.bf16.gmra.mrb[0].mxu0 %v115
    %v241 = vpop.f32.mrb[0].mxu0
    %v242 = vadd.f32 0.0, %v241
    %v243 = vpop.f32.mrb[0].mxu0
    %v244 = vpop.f32.mrb[0].mxu0
    %v245 = vadd.f32 0.0, %v244
    %v246 = vpop.f32.mrb[0].mxu0
    %247 = vmatprep.mubr.bf16.mxu0 0
    %248 = vmatmul.mubr.bf16.gmra.mrb[0].mxu0 %v116
    %v249 = vpop.f32.mrb[0].mxu0
    %v250 = vadd.f32 0.0, %v249
    %v251 = vpop.f32.mrb[0].mxu0
    %v252 = vpop.f32.mrb[0].mxu0
    %v253 = vadd.f32 0.0, %v252
    %v254 = vpop.f32.mrb[0].mxu0
    %255 = vmatprep.mubr.bf16.mxu0 0
    %256 = vmatmul.mubr.bf16.gmra.mrb[0].mxu0 %v117
    %v257 = vpop.f32.mrb[0].mxu0
    %v258 = vadd.f32 0.0, %v257
    %v259 = vpop.f32.mrb[0].mxu0
    %v260 = vpop.f32.mrb[0].mxu0
    %v261 = vadd.f32 0.0, %v260
    %v262 = vpop.f32.mrb[0].mxu0
    %263 = vmatprep.mubr.bf16.mxu0 0
    %264 = vmatmul.mubr.bf16.gmra.mrb[0].mxu0 %v118
    %v265 = vpop.f32.mrb[0].mxu0
    %v266 = vadd.f32 0.0, %v265
    %v267 = vpop.f32.mrb[0].mxu0
    %v268 = vpop.f32.mrb[0].mxu0
    %v269 = vadd.f32 0.0, %v268
    %v270 = vpop.f32.mrb[0].mxu0
    %271 = vdwg.mxu0
    %v272 = vld [vmem:[#allocation2] sm:$0xff]
    %v273 = vld [vmem:[#allocation2 + $0x8] sm:$0xff]
    %vm274 = vcmp.gt.f32.partialorder %v272, 1.0
    %vm275 = vcmp.gt.f32.partialorder %v273, 1.0
    %v276 = vmul.f32 %v272, 0.9
    %v277 = vmul.f32 %v273, 0.9
    %v278 = vadd.f32 %v276, %v210
    %v279 = vadd.f32 %v277, %v213
    %v280 = vsel %vm274, 1.0, 0.0
    %v281 = vsel %vm275, 1.0, 0.0
    %v282 = vsub.f32 %v278, %v280
    %v283 = vsub.f32 %v279, %v281
    %vm284 = vcmp.gt.f32.partialorder %v282, 1.0
    %vm285 = vcmp.gt.f32.partialorder %v283, 1.0
    %v286 = vsel %vm284, 1, 0
    %v287 = vsel %vm285, 1, 0
    %v288 = vcvt.s32.f32 %v286
    %v289 = vcvt.s32.f32 %v287
    %v290 = vpack.c.bf16 %v289, %v288
    %v292 = vunpack.c.l.b16 %v290
    %v293 = vunpack.c.h.b16 %v290
    %v294 = vpack.c.b16 %v292, %v292
    %v295 = vpack.c.b16 %v293, %v293
    %298 = vst [vmem:[#allocation8] sm:$0xf] %v294
    %299 = vst [vmem:[#allocation8 + $0x4] sm:$0xf] %v295
    %v300 = vmul.f32 %v282, 0.9
    %v301 = vmul.f32 %v283, 0.9
    %v302 = vadd.f32 %v300, %v218
    %v303 = vadd.f32 %v301, %v221
    %v304 = vsel %vm284, 1.0, 0.0
    %v305 = vsel %vm285, 1.0, 0.0
    %v306 = vsub.f32 %v302, %v304
    %v307 = vsub.f32 %v303, %v305
    %vm308 = vcmp.gt.f32.partialorder %v306, 1.0
    %vm309 = vcmp.gt.f32.partialorder %v307, 1.0
    %v310 = vsel %vm308, 1, 0
    %v311 = vsel %vm309, 1, 0
    %v312 = vcvt.s32.f32 %v310
    %v313 = vcvt.s32.f32 %v311
    %v314 = vpack.c.bf16 %v313, %v312
    %v316 = vunpack.c.l.b16 %v314
    %v317 = vunpack.c.h.b16 %v314
    %v318 = vpack.c.b16 %v316, %v316
    %v319 = vpack.c.b16 %v317, %v317
    %322 = vst [vmem:[#allocation8 + $0x8] sm:$0xf] %v318
    %323 = vst [vmem:[#allocation8 + $0xc] sm:$0xf] %v319
    %v324 = vmul.f32 %v306, 0.9
    %v325 = vmul.f32 %v307, 0.9
    %v326 = vadd.f32 %v324, %v226
    %v327 = vadd.f32 %v325, %v229
    %v328 = vsel %vm308, 1.0, 0.0
    %v329 = vsel %vm309, 1.0, 0.0
    %v330 = vsub.f32 %v326, %v328
    %v331 = vsub.f32 %v327, %v329
    %vm332 = vcmp.gt.f32.partialorder %v330, 1.0
    %vm333 = vcmp.gt.f32.partialorder %v331, 1.0
    %v334 = vsel %vm332, 1, 0
    %v335 = vsel %vm333, 1, 0
    %v336 = vcvt.s32.f32 %v334
    %v337 = vcvt.s32.f32 %v335
    %v338 = vpack.c.bf16 %v337, %v336
    %v340 = vunpack.c.l.b16 %v338
    %v341 = vunpack.c.h.b16 %v338
    %v342 = vpack.c.b16 %v340, %v340
    %v343 = vpack.c.b16 %v341, %v341
    %346 = vst [vmem:[#allocation8 + $0x10] sm:$0xf] %v342
    %347 = vst [vmem:[#allocation8 + $0x14] sm:$0xf] %v343
    %v348 = vmul.f32 %v330, 0.9
    %v349 = vmul.f32 %v331, 0.9
    %v350 = vadd.f32 %v348, %v234
    %v351 = vadd.f32 %v349, %v237
    %v352 = vsel %vm332, 1.0, 0.0
    %v353 = vsel %vm333, 1.0, 0.0
    %v354 = vsub.f32 %v350, %v352
    %v355 = vsub.f32 %v351, %v353
    %vm356 = vcmp.gt.f32.partialorder %v354, 1.0
    %vm357 = vcmp.gt.f32.partialorder %v355, 1.0
    %v358 = vsel %vm356, 1, 0
    %v359 = vsel %vm357, 1, 0
    %v360 = vcvt.s32.f32 %v358
    %v361 = vcvt.s32.f32 %v359
    %v362 = vpack.c.bf16 %v361, %v360
    %v364 = vunpack.c.l.b16 %v362
    %v365 = vunpack.c.h.b16 %v362
    %v366 = vpack.c.b16 %v364, %v364
    %v367 = vpack.c.b16 %v365, %v365
    %370 = vst [vmem:[#allocation8 + $0x18] sm:$0xf] %v366
    %371 = vst [vmem:[#allocation8 + $0x1c] sm:$0xf] %v367
    %v372 = vmul.f32 %v354, 0.9
    %v373 = vmul.f32 %v355, 0.9
    %v374 = vadd.f32 %v372, %v242
    %v375 = vadd.f32 %v373, %v245
    %v376 = vsel %vm356, 1.0, 0.0
    %v377 = vsel %vm357, 1.0, 0.0
    %v378 = vsub.f32 %v374, %v376
    %v379 = vsub.f32 %v375, %v377
    %vm380 = vcmp.gt.f32.partialorder %v378, 1.0
    %vm381 = vcmp.gt.f32.partialorder %v379, 1.0
    %v382 = vsel %vm380, 1, 0
    %v383 = vsel %vm381, 1, 0
    %v384 = vcvt.s32.f32 %v382
    %v385 = vcvt.s32.f32 %v383
    %v386 = vpack.c.bf16 %v385, %v384
    %v388 = vunpack.c.l.b16 %v386
    %v389 = vunpack.c.h.b16 %v386
    %v390 = vpack.c.b16 %v388, %v388
    %v391 = vpack.c.b16 %v389, %v389
    %394 = vst [vmem:[#allocation8 + $0x20] sm:$0xf] %v390
    %395 = vst [vmem:[#allocation8 + $0x24] sm:$0xf] %v391
    %v396 = vmul.f32 %v378, 0.9
    %v397 = vmul.f32 %v379, 0.9
    %v398 = vadd.f32 %v396, %v250
    %v399 = vadd.f32 %v397, %v253
    %v400 = vsel %vm380, 1.0, 0.0
    %v401 = vsel %vm381, 1.0, 0.0
    %v402 = vsub.f32 %v398, %v400
    %v403 = vsub.f32 %v399, %v401
    %vm404 = vcmp.gt.f32.partialorder %v402, 1.0
    %vm405 = vcmp.gt.f32.partialorder %v403, 1.0
    %v406 = vsel %vm404, 1, 0
    %v407 = vsel %vm405, 1, 0
    %v408 = vcvt.s32.f32 %v406
    %v409 = vcvt.s32.f32 %v407
    %v410 = vpack.c.bf16 %v409, %v408
    %v412 = vunpack.c.l.b16 %v410
    %v413 = vunpack.c.h.b16 %v410
    %v414 = vpack.c.b16 %v412, %v412
    %v415 = vpack.c.b16 %v413, %v413
    %418 = vst [vmem:[#allocation8 + $0x28] sm:$0xf] %v414
    %419 = vst [vmem:[#allocation8 + $0x2c] sm:$0xf] %v415
    %v420 = vmul.f32 %v402, 0.9
    %v421 = vmul.f32 %v403, 0.9
    %v422 = vadd.f32 %v420, %v258
    %v423 = vadd.f32 %v421, %v261
    %v424 = vsel %vm404, 1.0, 0.0
    %v425 = vsel %vm405, 1.0, 0.0
    %v426 = vsub.f32 %v422, %v424
    %v427 = vsub.f32 %v423, %v425
    %vm428 = vcmp.gt.f32.partialorder %v426, 1.0
    %vm429 = vcmp.gt.f32.partialorder %v427, 1.0
    %v430 = vsel %vm428, 1, 0
    %v431 = vsel %vm429, 1, 0
    %v432 = vcvt.s32.f32 %v430
    %v433 = vcvt.s32.f32 %v431
    %v434 = vpack.c.bf16 %v433, %v432
    %v436 = vunpack.c.l.b16 %v434
    %v437 = vunpack.c.h.b16 %v434
    %v438 = vpack.c.b16 %v436, %v436
    %v439 = vpack.c.b16 %v437, %v437
    %442 = vst [vmem:[#allocation8 + $0x30] sm:$0xf] %v438
    %443 = vst [vmem:[#allocation8 + $0x34] sm:$0xf] %v439
    %v444 = vmul.f32 %v426, 0.9
    %v445 = vmul.f32 %v427, 0.9
    %v446 = vadd.f32 %v444, %v266
    %v447 = vadd.f32 %v445, %v269
    %v448 = vsel %vm428, 1.0, 0.0
    %v449 = vsel %vm429, 1.0, 0.0
    %v450 = vsub.f32 %v446, %v448
    %v451 = vsub.f32 %v447, %v449
    %vm452 = vcmp.gt.f32.partialorder %v450, 1.0
    %vm453 = vcmp.gt.f32.partialorder %v451, 1.0
    %v454 = vsel %vm452, 1, 0
    %v455 = vsel %vm453, 1, 0
    %v456 = vcvt.s32.f32 %v454
    %v457 = vcvt.s32.f32 %v455
    %v458 = vpack.c.bf16 %v457, %v456
    %v460 = vunpack.c.l.b16 %v458
    %v461 = vunpack.c.h.b16 %v458
    %v462 = vpack.c.b16 %v460, %v460
    %v463 = vpack.c.b16 %v461, %v461
    %466 = vst [vmem:[#allocation8 + $0x38] sm:$0xf] %v462
    %467 = vst [vmem:[#allocation8 + $0x3c] sm:$0xf] %v463
    %468 = vst [vmem:[#allocation2] sm:$0xff] %v450
    %469 = vst [vmem:[#allocation2 + $0x8] sm:$0xff] %v451
    // Predicated region
    $region22: #{tpu_custom_call.1} parent=1 // pred_check
      _
    $region23: #{tpu_custom_call.1} parent=1 // pred_check_branch
      %471 = sbr.rel (0) target = $region25
    $region24: #{tpu_custom_call.1} parent=1 // pred_region
      %s473 = ssub.s32 1024, 1024
      %474 = vsyncadd [#allocation5], %s473
      %s475 = sshll.u32 [#allocation8], 4
      %s476 = int_to_ptr.vmem [resolvable:$true] %s475
      %481 = dma.vmem_to_hbm [thread:$0]  %s476, 1024, %s2, [#allocation5], 64, 64, 4
    $region25: #{tpu_custom_call.1} parent=1 // pred_fallthru
      _
    // Predicated region
    $region26: #{tpu_custom_call.1} parent=1 // pred_check
      _
    $region27: #{tpu_custom_call.1} parent=1 // pred_check_branch
      %483 = sbr.rel (0) target = $region29
    $region28: #{tpu_custom_call.1} parent=1 // pred_region
      %484 = dma.done [#allocation5], 1024
    $region29: #{tpu_custom_call.1} parent=1 // pred_fallthru
      _
    %485 = vsyncpa [#allocation4], 1
    %486 = vsyncpa [#allocation7], 1
    %487 = vsyncpa [#allocation5], 1

</llo_original>
